<compile_context>
chip_gen: v7x
topology: tpu7x:2x2x1
jax: 0.10.0
libtpu: 0.0.40
codegen_flags: <defaults>
</compile_context>

<pallas_src>
import functools

import jax
import jax.numpy as jnp
from jax.experimental import pallas as pl
from jax.experimental.pallas import tpu as pltpu

LANE = 128  # lane-dense output tile width


def _round_up(x, m):
    return (x + m - 1) // m * m


# ----------------------------------------------------------------------------- kernel
def _value_net_kernel(x_ref, p_ref, o_ref, *, S, F1, F2, C2, RB, RH):
    """x_ref: (tm, S) state tile.  p_ref: packed parameter slab (resident).
    o_ref: (tm, LANE) lane-dense output tile (value broadcast across lanes)."""
    x = x_ref[...]
    w1 = p_ref[0:S, 0:F1]                 # (S,  F1)
    w2 = p_ref[0:F1, C2:C2 + F2]          # (F1, F2)   lane-aligned column block
    b1 = p_ref[RB:RB + 1, 0:F1]           # (1,  F1)   sublane-aligned row
    b2 = p_ref[RB:RB + 1, C2:C2 + F2]     # (1,  F2)
    w3 = p_ref[RH:RH + 1, C2:C2 + F2]     # (1,  F2)   head weights as a row
    b3 = p_ref[RH:RH + 1, 0:1]            # (1,  1)    head bias

    # fc1 + relu  (MXU)
    h = jnp.dot(x, w1, preferred_element_type=jnp.float32)
    h = jnp.maximum(h + b1, 0.0)
    # fc2 + relu  (MXU)
    h = jnp.dot(h, w2, preferred_element_type=jnp.float32)
    h = jnp.maximum(h + b2, 0.0)
    # value head (out_features == 1): VPU multiply + lane reduce instead of an
    # N=1 MXU push (avoids a third serialized MXU round-trip).
    v = jnp.sum(h * w3, axis=-1, keepdims=True) + b3      # (tm, 1)

    # lane-dense store: broadcast across the 128-lane tile -> unmasked vst.
    o_ref[...] = jnp.broadcast_to(v, o_ref.shape).astype(o_ref.dtype)


# ----------------------------------------------------------------------------- wrapper
def value_network_forward(state, params, *, block_b=128):
    """state: (B, state_dim) f32.  params: dict from init_value_network_params."""
    slab = params["packed"]
    S_p, F1, F2 = params["dims"]
    C2, RB, RH = params["offsets"]
    B, S = state.shape
    assert S == S_p, f"state dim mismatch: {S} vs {S_p}"

    # Tile the batch axis; tm is a multiple of 8 (sublane rule) and <= block_b.
    tm = min(block_b, _round_up(B, 8))
    B_pad = _round_up(B, tm)
    if B_pad != B:
        state = jnp.pad(state, ((0, B_pad - B), (0, 0)))
    grid = (B_pad // tm,)

    kernel = functools.partial(
        _value_net_kernel, S=S, F1=F1, F2=F2, C2=C2, RB=RB, RH=RH
    )

    out = pl.pallas_call(
        kernel,
        out_shape=jax.ShapeDtypeStruct((B_pad, LANE), jnp.float32),
        grid=grid,
        in_specs=[
            pl.BlockSpec((tm, S), lambda i: (i, 0)),          # state tile
            pl.BlockSpec(slab.shape, lambda i: (0, 0)),       # packed params, resident
        ],
        out_specs=pl.BlockSpec((tm, LANE), lambda i: (i, 0)),
        compiler_params=pltpu.CompilerParams(
            dimension_semantics=("parallel",),   # shards batch tiles across TCs on v7x
        ),
    )(state, slab)

    return out[:B, :1]


# ----------------------------------------------------------------------------- params
def pack_value_network_params(w1, b1, w2, b2, w3, b3):
    """Pack all layer params into one f32 slab (single VMEM operand / single DMA).

    Layout (rows x cols), tile-aligned so in-kernel slices stay lane/sublane aligned:
      C2 = round_up(F1, 128)                # column start of the fc2/head region
      rows [0:S),  cols [0:F1)              -> w1  (S, F1)
      rows [0:F1), cols [C2:C2+F2)          -> w2  (F1, F2)
      row  RB = round_up(max(S,F1), 8)      -> cols [0:F1): b1 ; cols [C2:): b2
      row  RH = RB + 8                      -> col 0: b3 ; cols [C2:): w3 (head row)
    """
    S, F1 = w1.shape
    F1b, F2 = w2.shape
    assert F1b == F1
    C2 = _round_up(F1, LANE)
    RB = _round_up(max(S, F1), 8)
    RH = RB + 8
    n_rows = _round_up(RH + 1, 8)
    n_cols = C2 + _round_up(F2, LANE)

    slab = jnp.zeros((n_rows, n_cols), jnp.float32)
    slab = slab.at[0:S, 0:F1].set(w1)
    slab = slab.at[0:F1, C2:C2 + F2].set(w2)
    slab = slab.at[RB, 0:F1].set(b1.reshape(F1))
    slab = slab.at[RB, C2:C2 + F2].set(b2.reshape(F2))
    slab = slab.at[RH, C2:C2 + F2].set(w3.reshape(F2))
    slab = slab.at[RH, 0].set(b3.reshape(()))
    return slab, (C2, RB, RH)


def init_value_network_params(key, state_dim, hidden_dims):
    """PyTorch nn.Linear default init: U(-1/sqrt(fan_in), +1/sqrt(fan_in)).
    Weights stored as (in, out); biases as (1, out). Params are packed once here."""
    fc1, fc2 = hidden_dims
    keys = jax.random.split(key, 6)

    def lin(kw, kb, fan_in, fan_out):
        bound = 1.0 / jnp.sqrt(jnp.float32(fan_in))
        w = jax.random.uniform(kw, (fan_in, fan_out), jnp.float32, -bound, bound)
        b = jax.random.uniform(kb, (1, fan_out), jnp.float32, -bound, bound)
        return w, b

    w1, b1 = lin(keys[0], keys[1], state_dim, fc1)
    w2, b2 = lin(keys[2], keys[3], fc1, fc2)
    w3, b3 = lin(keys[4], keys[5], fc2, 1)

    slab, offsets = pack_value_network_params(w1, b1, w2, b2, w3, b3)
    return {
        "packed": slab,
        "dims": (state_dim, fc1, fc2),
        "offsets": offsets,
        "raw": (w1, b1, w2, b2, w3, b3),  # kept only for the reference check
    }


def _reference_forward(state, params):
    w1, b1, w2, b2, w3, b3 = params["raw"]
    h = jnp.maximum(state @ w1 + b1, 0.0)
    h = jnp.maximum(h @ w2 + b2, 0.0)
    return h @ w3 + b3


# ----------------------------------------------------------------------------- main
if __name__ == "__main__":
    key = jax.random.PRNGKey(0)
    k_params, k_state = jax.random.split(key)

    batch = 8
    state_dim = 8
    hidden_dims = (32, 32)

    params = init_value_network_params(k_params, state_dim, hidden_dims)
    state = jax.random.normal(k_state, (batch, state_dim), jnp.float32)

    v = value_network_forward(state, params)
    v = jax.block_until_ready(v)

    v_ref = _reference_forward(state, params)
    assert v.shape == (batch, 1)
    assert jnp.allclose(v, v_ref, atol=1e-5, rtol=1e-5)

    print("KERNEL_OK")
</pallas_src>

<mosaic_0001>
module attributes {stable_mosaic.version = 11 : i64} {
  func.func @_value_net_kernel(%arg0: i32, %arg1: memref<8x8xf32, #tpu.memory_space<vmem>>, %arg2: memref<48x256xf32, #tpu.memory_space<vmem>>, %arg3: memref<8x128xf32, #tpu.memory_space<vmem>>) attributes {dimension_semantics = [#tpu.dimension_semantics<parallel>], iteration_bounds = array<i64: 1>, scalar_prefetch = 0 : i64, scratch_operands = 0 : i64, tpu.core_type = #tpu.core_type<tc>, window_params = [{transform_indices = @transform_0, window_bounds = array<i64: 8, 8>}, {pipeline_mode = #tpu.pipeline_mode<synchronous>, transform_indices = @transform_1, window_bounds = array<i64: 48, 256>}, {transform_indices = @transform_2, window_bounds = array<i64: 8, 128>}]} {
    %c0 = arith.constant 0 : index
    %c0_0 = arith.constant 0 : index
    %0 = vector.load %arg1[%c0, %c0_0] : memref<8x8xf32, #tpu.memory_space<vmem>>, vector<8x8xf32>
    %c0_1 = arith.constant 0 : index
    %c0_2 = arith.constant 0 : index
    %1 = vector.load %arg2[%c0_1, %c0_2] : memref<48x256xf32, #tpu.memory_space<vmem>>, vector<8x32xf32>
    %c0_3 = arith.constant 0 : index
    %c128 = arith.constant 128 : index
    %2 = vector.load %arg2[%c0_3, %c128] : memref<48x256xf32, #tpu.memory_space<vmem>>, vector<32x32xf32>
    %c32 = arith.constant 32 : index
    %c0_4 = arith.constant 0 : index
    %3 = vector.load %arg2[%c32, %c0_4] : memref<48x256xf32, #tpu.memory_space<vmem>>, vector<1x32xf32>
    %c32_5 = arith.constant 32 : index
    %c128_6 = arith.constant 128 : index
    %4 = vector.load %arg2[%c32_5, %c128_6] : memref<48x256xf32, #tpu.memory_space<vmem>>, vector<1x32xf32>
    %c40 = arith.constant 40 : index
    %c128_7 = arith.constant 128 : index
    %5 = vector.load %arg2[%c40, %c128_7] : memref<48x256xf32, #tpu.memory_space<vmem>>, vector<1x32xf32>
    %c40_8 = arith.constant 40 : index
    %c0_9 = arith.constant 0 : index
    %6 = vector.load %arg2[%c40_8, %c0_9] : memref<48x256xf32, #tpu.memory_space<vmem>>, vector<1x1xf32>
    %cst = arith.constant dense<0.000000e+00> : vector<8x32xf32>
    %7 = tpu.matmul %0, %1, %cst {dimension_numbers = #tpu.dot_dimension_numbers<[1], [0], [0], [1], [0, 0, 1, 1], [], []>} : vector<8x8xf32>, vector<8x32xf32>, vector<8x32xf32> -> vector<8x32xf32>
    %8 = vector.broadcast %3 : vector<1x32xf32> to vector<8x32xf32>
    %9 = arith.addf %7, %8 : vector<8x32xf32>
    %cst_10 = arith.constant 0.000000e+00 : f32
    %10 = vector.broadcast %cst_10 : f32 to vector<8x32xf32>
    %11 = arith.maximumf %9, %10 : vector<8x32xf32>
    %cst_11 = arith.constant dense<0.000000e+00> : vector<8x32xf32>
    %12 = tpu.matmul %11, %2, %cst_11 {dimension_numbers = #tpu.dot_dimension_numbers<[1], [0], [0], [1], [0, 0, 1, 1], [], []>} : vector<8x32xf32>, vector<32x32xf32>, vector<8x32xf32> -> vector<8x32xf32>
    %13 = vector.broadcast %4 : vector<1x32xf32> to vector<8x32xf32>
    %14 = arith.addf %12, %13 : vector<8x32xf32>
    %cst_12 = arith.constant 0.000000e+00 : f32
    %15 = vector.broadcast %cst_12 : f32 to vector<8x32xf32>
    %16 = arith.maximumf %14, %15 : vector<8x32xf32>
    %17 = vector.broadcast %5 : vector<1x32xf32> to vector<8x32xf32>
    %18 = arith.mulf %16, %17 : vector<8x32xf32>
    %cst_13 = arith.constant dense<0.000000e+00> : vector<8xf32>
    %19 = vector.multi_reduction <add>, %18, %cst_13 [1] : vector<8x32xf32> to vector<8xf32>
    %20 = vector.shape_cast %19 : vector<8xf32> to vector<8x1xf32>
    %21 = vector.broadcast %6 : vector<1x1xf32> to vector<8x1xf32>
    %22 = arith.addf %20, %21 : vector<8x1xf32>
    %23 = vector.shape_cast %22 : vector<8x1xf32> to vector<8x1xf32>
    %24 = vector.broadcast %23 : vector<8x1xf32> to vector<8x128xf32>
    %c0_14 = arith.constant 0 : index
    %c0_15 = arith.constant 0 : index
    %25 = vector.load %arg3[%c0_14, %c0_15] : memref<8x128xf32, #tpu.memory_space<vmem>>, vector<8x128xf32>
    tpu.vector_store %arg3[%c0_14, %c0_15], %24 {strides = array<i32>} : memref<8x128xf32, #tpu.memory_space<vmem>>, vector<8x128xf32>,
    return
  }
  func.func @transform_0(%arg0: i32) -> (i32, i32) {
    %c0_i32 = arith.constant 0 : i32
    %c0_i32_0 = arith.constant 0 : i32
    return %arg0, %c0_i32 : i32, i32
  }
  func.func @transform_1(%arg0: i32) -> (i32, i32) {
    %c0_i32 = arith.constant 0 : i32
    %c0_i32_0 = arith.constant 0 : i32
    %c0_i32_1 = arith.constant 0 : i32
    return %c0_i32, %c0_i32_0 : i32, i32
  }
  func.func @transform_2(%arg0: i32) -> (i32, i32) {
    %c0_i32 = arith.constant 0 : i32
    %c0_i32_0 = arith.constant 0 : i32
    return %arg0, %c0_i32 : i32, i32
  }
}

</mosaic_0001>

<llo_original>
// kernel: tpu_custom_call.1
$region0: #{tpu_custom_call.1}
  #allocation0 [shape = 'u32[]', space=smem, size = 0x4, offset = 0x4, fixed_abs, tag = 'smem constant byte address 0x4 - core index']
  #allocation1 [shape = 'u32[144,128]{1,0:T(1,128)}', space=vmem, size = 0x12000, scoped, tag = 'internal scratch']
  %s0 = inlined_call_operand.hbm [shape: f32[8,8], index: 0, kind: input, shape index: {}]
  %s1 = inlined_call_operand.hbm [shape: f32[48,256], index: 1, kind: input, shape index: {}]
  %s2 = inlined_call_operand.hbm [shape: f32[8,128], index: 2, kind: output, shape index: {}]
  %s3 = sld [smem:[#allocation0]]
  $region26: #{tpu_custom_call.1} parent=0
    _
  %s5 = ssub.s32 1, %s3
  %s6 = scalar_select 0, %s5, %s3
  $region1: #{tpu_custom_call.1} parent=0
    #allocation2 [shape = 'u8[4096]{0}', space=vmem, size = 0x1000, scoped, tag = 'input window, operand 0, single buffered']
    #allocation3 [shape = 's32[1]{0}', space=sflag, size = 0x4, scoped, tag = 'scoped memory for tpu_custom_call.1']
    #allocation4 [shape = 's32[1]{0}', space=sflag, size = 0x4, scoped, tag = 'scoped memory for tpu_custom_call.1']
    #allocation5 [shape = 'u8[49152]{0}', space=vmem, size = 0xc000, scoped, tag = 'input window, operand 1, single buffered']
    #allocation6 [shape = 's32[1]{0}', space=sflag, size = 0x4, scoped, tag = 'scoped memory for tpu_custom_call.1']
    #allocation7 [shape = 'u8[4096]{0}', space=vmem, size = 0x1000, scoped, tag = 'output window, operand 0, single buffered']
    %7 = vsyncpa [#allocation3], 0
    %8 = vsyncpa [#allocation6], 0
    %9 = vsyncpa [#allocation4], 0
    // Predicated region
    $region2: #{tpu_custom_call.1} parent=1 // pred_check
      _
    $region3: #{tpu_custom_call.1} parent=1 // pred_check_branch
      %11 = sbr.rel (0) target = $region5
    $region4: #{tpu_custom_call.1} parent=1 // pred_region
      %s13 = ssub.s32 128, 128
      %14 = vsyncadd [#allocation3], %s13
      %s16 = sshll.u32 [#allocation2], 4
      %s17 = int_to_ptr.vmem [resolvable:$true] %s16
      %19 = dma.hbm_to_vmem [thread:$0]  %s0, 128, %s17, [#allocation3]
    $region5: #{tpu_custom_call.1} parent=1 // pred_fallthru
      _
    // Predicated region
    $region6: #{tpu_custom_call.1} parent=1 // pred_check
      _
    $region7: #{tpu_custom_call.1} parent=1 // pred_check_branch
      %21 = sbr.rel (0) target = $region9
    $region8: #{tpu_custom_call.1} parent=1 // pred_region
      %s23 = ssub.s32 1536, 1536
      %24 = vsyncadd [#allocation6], %s23
      %s25 = sshll.u32 [#allocation5], 4
      %s26 = int_to_ptr.vmem [resolvable:$true] %s25
      %31 = dma.hbm_to_vmem [thread:$0]  %s1, 1536, %s26, [#allocation6], 256, 256, 16
    $region9: #{tpu_custom_call.1} parent=1 // pred_fallthru
      _
    // Predicated region
    $region10: #{tpu_custom_call.1} parent=1 // pred_check
      _
    $region11: #{tpu_custom_call.1} parent=1 // pred_check_branch
      %33 = sbr.rel (0) target = $region13
    $region12: #{tpu_custom_call.1} parent=1 // pred_region
      %34 = dma.done [#allocation3], 128
    $region13: #{tpu_custom_call.1} parent=1 // pred_fallthru
      _
    // Predicated region
    $region14: #{tpu_custom_call.1} parent=1 // pred_check
      _
    $region15: #{tpu_custom_call.1} parent=1 // pred_check_branch
      %36 = sbr.rel (0) target = $region17
    $region16: #{tpu_custom_call.1} parent=1 // pred_region
      %37 = dma.done [#allocation6], 1536
    $region17: #{tpu_custom_call.1} parent=1 // pred_fallthru
      _
    %v38 = vld [vmem:[#allocation2] sm:$0xff]
    %v39 = vld [vmem:[#allocation5] sm:$0xff]
    %v40 = vld [vmem:[#allocation5 + $0x8] sm:$0xff]
    %v41 = vld [vmem:[#allocation5 + $0x18] sm:$0xff]
    %v42 = vld [vmem:[#allocation5 + $0x28] sm:$0xff]
    %v43 = vld [vmem:[#allocation5 + $0x38] sm:$0xff]
    %v44 = vld [vmem:[#allocation5 + $0x40] ss:$0 sm:$0xff]
    %v45 = vld [vmem:[#allocation5 + $0x48] ss:$0 sm:$0xff]
    %v46 = vld [vmem:[#allocation5 + $0x58] ss:$0 sm:$0xff]
    %v47 = vld [vmem:[#allocation5 + $0x50] ss:$0 sm:$0xff]
    %vm48 = vcmask 64512
    %v50 = vsel %vm48, %v38, 0
    %52 = vmatprep.subr.mxu0 0.0
    %53 = vmatpush1.msra.mxu0 %v39
    %54 = vmatprep.subr.mxu0 0.0
    %55 = vmatpush1.msra.mxu0 0.0
    %56 = vmatprep.subr.mxu0 0.0
    %57 = vmatpush1.msra.mxu0 0.0
    %58 = vmatprep.subr.mxu0 0.0
    %59 = vmatpush1.msra.mxu0 0.0
    %60 = vmatprep.subr.mxu0 0.0
    %61 = vmatpush1.msra.mxu0 0.0
    %62 = vmatprep.subr.mxu0 0.0
    %63 = vmatpush1.msra.mxu0 0.0
    %64 = vmatprep.subr.mxu0 0.0
    %65 = vmatpush1.msra.mxu0 0.0
    %66 = vmatprep.subr.mxu0 0.0
    %67 = vmatpush1.msra.mxu0 0.0
    %68 = vmatprep.subr.mxu0 0.0
    %69 = vmatpush1.msra.mxu0 0.0
    %70 = vmatprep.subr.mxu0 0.0
    %71 = vmatpush1.msra.mxu0 0.0
    %72 = vmatprep.subr.mxu0 0.0
    %73 = vmatpush1.msra.mxu0 0.0
    %74 = vmatprep.subr.mxu0 0.0
    %75 = vmatpush1.msra.mxu0 0.0
    %76 = vmatprep.subr.mxu0 0.0
    %77 = vmatpush1.msra.mxu0 0.0
    %78 = vmatprep.subr.mxu0 0.0
    %79 = vmatpush1.msra.mxu0 0.0
    %80 = vmatprep.subr.mxu0 0.0
    %81 = vmatpush1.msra.mxu0 0.0
    %82 = vmatprep.subr.mxu0 0.0
    %83 = vmatpush1.msra.mxu0 0.0
    %84 = vmatprep.subr.mxu0 0.0
    %85 = vmatpush1.msra.mxu0 0.0
    %86 = vmatprep.subr.mxu0 0.0
    %87 = vmatpush1.msra.mxu0 0.0
    %88 = vmatprep.subr.mxu0 0.0
    %89 = vmatpush1.msra.mxu0 0.0
    %90 = vmatprep.subr.mxu0 0.0
    %91 = vmatpush1.msra.mxu0 0.0
    %92 = vmatprep.subr.mxu0 0.0
    %93 = vmatpush1.msra.mxu0 0.0
    %94 = vmatprep.subr.mxu0 0.0
    %95 = vmatpush1.msra.mxu0 0.0
    %96 = vmatprep.subr.mxu0 0.0
    %97 = vmatpush1.msra.mxu0 0.0
    %98 = vmatprep.subr.mxu0 0.0
    %99 = vmatpush1.msra.mxu0 0.0
    %100 = vmatprep.subr.mxu0 0.0
    %101 = vmatpush1.msra.mxu0 0.0
    %102 = vmatprep.subr.mxu0 0.0
    %103 = vmatpush1.msra.mxu0 0.0
    %104 = vmatprep.subr.mxu0 0.0
    %105 = vmatpush1.msra.mxu0 0.0
    %106 = vmatprep.subr.mxu0 0.0
    %107 = vmatpush1.msra.mxu0 0.0
    %108 = vmatprep.subr.mxu0 0.0
    %109 = vmatpush1.msra.mxu0 0.0
    %110 = vmatprep.subr.mxu0 0.0
    %111 = vmatpush1.msra.mxu0 0.0
    %112 = vmatprep.subr.mxu0 0.0
    %113 = vmatpush1.msra.mxu0 0.0
    %114 = vmatprep.subr.mxu0 0.0
    %115 = vmatpush1.msra.mxu0 0.0
    %116 = vmatprep.mubr.f32.mxu0 0.0
    %117 = vmatmul.mubr.f32.gmra.mrb[0].mxu0 %v50
    %v118 = vpop.f32.mrb[0].mxu0
    %v119 = vadd.f32 %v44, %v118
    %v120 = vpop.f32.mrb[0].mxu0
    %121 = vdwg.mxu0
    %v122 = vmax.f32 %v119, 0.0
    %vm123 = vcmask 261120
    %v125 = vsel %vm123, %v122, 0
    %127 = vmatprep.subr.mxu0 0.0
    %128 = vmatpush1.msra.mxu0 %v40
    %129 = vmatprep.subr.mxu0 0.0
    %130 = vmatpush1.msra.mxu0 %v41
    %131 = vmatprep.subr.mxu0 0.0
    %132 = vmatpush1.msra.mxu0 %v42
    %133 = vmatprep.subr.mxu0 0.0
    %134 = vmatpush1.msra.mxu0 %v43
    %135 = vmatprep.subr.mxu0 0.0
    %136 = vmatpush1.msra.mxu0 0.0
    %137 = vmatprep.subr.mxu0 0.0
    %138 = vmatpush1.msra.mxu0 0.0
    %139 = vmatprep.subr.mxu0 0.0
    %140 = vmatpush1.msra.mxu0 0.0
    %141 = vmatprep.subr.mxu0 0.0
    %142 = vmatpush1.msra.mxu0 0.0
    %143 = vmatprep.subr.mxu0 0.0
    %144 = vmatpush1.msra.mxu0 0.0
    %145 = vmatprep.subr.mxu0 0.0
    %146 = vmatpush1.msra.mxu0 0.0
    %147 = vmatprep.subr.mxu0 0.0
    %148 = vmatpush1.msra.mxu0 0.0
    %149 = vmatprep.subr.mxu0 0.0
    %150 = vmatpush1.msra.mxu0 0.0
    %151 = vmatprep.subr.mxu0 0.0
    %152 = vmatpush1.msra.mxu0 0.0
    %153 = vmatprep.subr.mxu0 0.0
    %154 = vmatpush1.msra.mxu0 0.0
    %155 = vmatprep.subr.mxu0 0.0
    %156 = vmatpush1.msra.mxu0 0.0
    %157 = vmatprep.subr.mxu0 0.0
    %158 = vmatpush1.msra.mxu0 0.0
    %159 = vmatprep.subr.mxu0 0.0
    %160 = vmatpush1.msra.mxu0 0.0
    %161 = vmatprep.subr.mxu0 0.0
    %162 = vmatpush1.msra.mxu0 0.0
    %163 = vmatprep.subr.mxu0 0.0
    %164 = vmatpush1.msra.mxu0 0.0
    %165 = vmatprep.subr.mxu0 0.0
    %166 = vmatpush1.msra.mxu0 0.0
    %167 = vmatprep.subr.mxu0 0.0
    %168 = vmatpush1.msra.mxu0 0.0
    %169 = vmatprep.subr.mxu0 0.0
    %170 = vmatpush1.msra.mxu0 0.0
    %171 = vmatprep.subr.mxu0 0.0
    %172 = vmatpush1.msra.mxu0 0.0
    %173 = vmatprep.subr.mxu0 0.0
    %174 = vmatpush1.msra.mxu0 0.0
    %175 = vmatprep.subr.mxu0 0.0
    %176 = vmatpush1.msra.mxu0 0.0
    %177 = vmatprep.subr.mxu0 0.0
    %178 = vmatpush1.msra.mxu0 0.0
    %179 = vmatprep.subr.mxu0 0.0
    %180 = vmatpush1.msra.mxu0 0.0
    %181 = vmatprep.subr.mxu0 0.0
    %182 = vmatpush1.msra.mxu0 0.0
    %183 = vmatprep.subr.mxu0 0.0
    %184 = vmatpush1.msra.mxu0 0.0
    %185 = vmatprep.subr.mxu0 0.0
    %186 = vmatpush1.msra.mxu0 0.0
    %187 = vmatprep.subr.mxu0 0.0
    %188 = vmatpush1.msra.mxu0 0.0
    %189 = vmatprep.subr.mxu0 0.0
    %190 = vmatpush1.msra.mxu0 0.0
    %191 = vmatprep.mubr.f32.mxu0 0.0
    %192 = vmatmul.mubr.f32.gmra.mrb[0].mxu0 %v125
    %v193 = vpop.f32.mrb[0].mxu0
    %v194 = vadd.f32 %v45, %v193
    %v195 = vpop.f32.mrb[0].mxu0
    %196 = vdwg.mxu0
    %v197 = vmax.f32 %v194, 0.0
    %v198 = vmul.f32 %v197, %v46
    %v199 = vsel %vm123, %v198, 0.0
    %200 = vadd.xlane.f32.xlu0 %v199
    %v201 = vpop.xlane.xlu0 %200
    %v202 = vadd.f32 %v201, %v47
    %204 = vset.pattern.permute.xlu0 0
    %205 = vperm.xlu0 %204, %v202
    %v206 = vpop.permute.xlu0 %205
    %208 = vst [vmem:[#allocation7] sm:$0xff] %v206
    // Predicated region
    $region18: #{tpu_custom_call.1} parent=1 // pred_check
      _
    $region19: #{tpu_custom_call.1} parent=1 // pred_check_branch
      %210 = sbr.rel (0) target = $region21
    $region20: #{tpu_custom_call.1} parent=1 // pred_region
      %s212 = ssub.s32 128, 128
      %213 = vsyncadd [#allocation4], %s212
      %s215 = sshll.u32 [#allocation7], 4
      %s216 = int_to_ptr.vmem [resolvable:$true] %s215
      %218 = dma.vmem_to_hbm [thread:$0]  %s216, 128, %s2, [#allocation4]
    $region21: #{tpu_custom_call.1} parent=1 // pred_fallthru
      _
    // Predicated region
    $region22: #{tpu_custom_call.1} parent=1 // pred_check
      _
    $region23: #{tpu_custom_call.1} parent=1 // pred_check_branch
      %220 = sbr.rel (0) target = $region25
    $region24: #{tpu_custom_call.1} parent=1 // pred_region
      %221 = dma.done [#allocation4], 128
    $region25: #{tpu_custom_call.1} parent=1 // pred_fallthru
      _
    %222 = vsyncpa [#allocation3], 1
    %223 = vsyncpa [#allocation6], 1
    %224 = vsyncpa [#allocation4], 1

</llo_original>
